<compile_context>
chip_gen: v7x
topology: tpu7x:2x2x1
jax: 0.10.0
libtpu: 0.0.40
codegen_flags: <defaults>
</compile_context>

<pallas_src>
import functools

import jax
import jax.numpy as jnp
from jax.experimental import pallas as pl
from jax.experimental.pallas import tpu as pltpu


_MAX_BLOCK_B = 1024        # mem-bound roofline saturates around 512-1024 rows
_MIN_TILES = 4             # keep >=4 grid steps so 2-TC parts (v7x) can split
_F32_TEMP_COPIES = 6       # s, t/t_exp, s_shift, exp(s_shift), log_p, product
_VMEM_HEADROOM = 6 * 1024 * 1024
_FALLBACK_VMEM_CAP = 64 * 1024 * 1024   # conservative (v7x per-TC) fallback


def _round_up(x, m):
    return ((x + m - 1) // m) * m


def _vmem_limit_bytes():
    """Scoped-VMEM limit: ~3/4 of the chip's per-core VMEM, capped at 96 MiB."""
    cap = _FALLBACK_VMEM_CAP
    try:
        cap = int(pltpu.get_tpu_info().vmem_capacity_bytes)
    except Exception:
        pass
    return min((3 * cap) // 4, 96 * 1024 * 1024)


def _choose_block_b(n, c, itemsize, vmem_limit):
    """Largest batch tile that fits inputs + f32 intermediates in VMEM."""
    row_mult = 16 if itemsize < 4 else 8          # packed sublanes for bf16/f16
    budget = max(vmem_limit - _VMEM_HEADROOM, 4 * 1024 * 1024)
    # 2 inputs x 2 pipeline buffers + ~6 f32 temporaries of the (bb, C) tile.
    per_row_bytes = 2 * 2 * c * itemsize + _F32_TEMP_COPIES * c * 4
    bb = budget // max(per_row_bytes, 1)
    bb = max(row_mult, (bb // row_mult) * row_mult)
    bb = min(bb, _MAX_BLOCK_B)
    # Keep >= _MIN_TILES grid steps when N allows (v7x megacore sharding).
    per_tile = _round_up(pl.cdiv(n, _MIN_TILES), row_mult)
    bb = min(bb, max(row_mult, per_tile))
    # Never exceed the (rounded-up) batch.
    bb = min(bb, _round_up(n, row_mult))
    return bb


def _ce_loss_kernel(s_ref, t_ref, o_ref, *, inv_t, valid_rows, block_b,
                    mask_last):
    i = pl.program_id(0)

    # Multiply by precomputed 1/T instead of dividing per element.
    s = s_ref[...].astype(jnp.float32) * inv_t
    t = t_ref[...].astype(jnp.float32) * inv_t

    # Student log-softmax along the class (lane) axis.
    s_max = jnp.max(s, axis=-1, keepdims=True)
    s_shift = s - s_max
    s_lse = jnp.log(jnp.sum(jnp.exp(s_shift), axis=-1, keepdims=True))
    log_p = s_shift - s_lse                                        # (bb, C)

    # Teacher softmax folded into the dot product (q never materialized):
    #   sum_c q * log_p = (sum_c exp(t - max) * log_p) / (sum_c exp(t - max))
    t_exp = jnp.exp(t - jnp.max(t, axis=-1, keepdims=True))        # (bb, C)
    t_sum = jnp.sum(t_exp, axis=-1, keepdims=True)                 # (bb, 1)
    row_dot = jnp.sum(t_exp * log_p, axis=-1, keepdims=True)       # (bb, 1)

    # Per-row reciprocal on the EUP slot (approx) + one Newton step for ~f32
    # accuracy; only block_b of these per tile (~1/C of the element work).
    r = pl.reciprocal(t_sum, approx=True)
    r = r * (2.0 - t_sum * r)
    row_c = row_dot * r                                            # (bb, 1)

    def write(rc):
        # One small sublane reduce per tile; write a lane-dense (1, 8, 128)
        # partial block (unmasked vst) so the batch axis stays "parallel".
        o_ref[...] = jnp.full(o_ref.shape, jnp.sum(rc), dtype=jnp.float32)

    if mask_last:
        # Only the last tile can contain out-of-bounds (garbage) rows; all
        # per-row reductions above stay within a row, and the select below
        # runs before the cross-row sum, so garbage never contaminates it.
        last = pl.num_programs(0) - 1

        @pl.when(i == last)
        def _():
            row_idx = i * block_b + jax.lax.broadcasted_iota(
                jnp.int32, (block_b, 1), 0)
            write(jnp.where(row_idx < valid_rows, row_c, 0.0))

        @pl.when(i != last)
        def _():
            write(row_c)
    else:
        write(row_c)


def ce_loss(output_batch, teacher_outputs, temperature=1.0, block_b=None):
    """Pallas CE distillation loss. Inputs: (N, C) logits; returns scalar f32."""
    assert output_batch.ndim == 2
    assert output_batch.shape == teacher_outputs.shape
    n, c = output_batch.shape
    itemsize = max(output_batch.dtype.itemsize, teacher_outputs.dtype.itemsize)
    row_mult = 16 if itemsize < 4 else 8

    vmem_limit = _vmem_limit_bytes()
    if block_b is None:
        block_b = _choose_block_b(n, c, itemsize, vmem_limit)
    else:
        block_b = max(row_mult, _round_up(int(block_b), row_mult))
        block_b = min(block_b, _round_up(n, row_mult))

    num_tiles = pl.cdiv(n, block_b)
    mask_last = (n % block_b) != 0

    kernel = functools.partial(
        _ce_loss_kernel,
        inv_t=1.0 / float(temperature),
        valid_rows=n,
        block_b=block_b,
        mask_last=mask_last,
    )

    partials = pl.pallas_call(
        kernel,
        out_shape=jax.ShapeDtypeStruct((num_tiles, 8, 128), jnp.float32),
        grid_spec=pltpu.PrefetchScalarGridSpec(
            num_scalar_prefetch=0,
            grid=(num_tiles,),
            in_specs=[
                pl.BlockSpec((block_b, c), lambda i: (i, 0)),
                pl.BlockSpec((block_b, c), lambda i: (i, 0)),
            ],
            out_specs=pl.BlockSpec((1, 8, 128), lambda i: (i, 0, 0)),
        ),
        compiler_params=pltpu.CompilerParams(
            dimension_semantics=("parallel",),   # batch tiles are independent
            vmem_limit_bytes=int(vmem_limit),
        ),
    )(output_batch, teacher_outputs)

    t_ = float(temperature)
    scale = -(t_ * t_) / float(n)
    return scale * jnp.sum(partials[:, 0, 0])


def _ce_loss_ref(output_batch, teacher_outputs, temperature=1.0):
    T = temperature
    log_p = jax.nn.log_softmax(output_batch.astype(jnp.float32) / T, axis=1)
    q = jax.nn.softmax(teacher_outputs.astype(jnp.float32) / T, axis=1)
    return -T * T * jnp.sum(log_p * q) / output_batch.shape[0]


if __name__ == "__main__":
    key = jax.random.PRNGKey(0)
    k1, k2, k3, k4 = jax.random.split(key, 4)

    # Case 1: aligned shapes (lane-dense C), auto tile size (>=4 tiles).
    N1, C1, T1 = 64, 256, 2.0
    s1 = jax.random.normal(k1, (N1, C1), dtype=jnp.float32)
    t1 = jax.random.normal(k2, (N1, C1), dtype=jnp.float32)
    out1 = jax.block_until_ready(ce_loss(s1, t1, temperature=T1))
    ref1 = _ce_loss_ref(s1, t1, temperature=T1)
    assert jnp.allclose(out1, ref1, rtol=1e-4, atol=1e-5), (out1, ref1)

    # Case 2: same data, caller-forced tile size (per-tile partials path).
    out2 = jax.block_until_ready(ce_loss(s1, t1, temperature=T1, block_b=16))
    assert jnp.allclose(out2, ref1, rtol=1e-4, atol=1e-5), (out2, ref1)

    # Case 3: ragged batch (non-divisible N, masked last tile, no pad copy)
    #         and class count not a multiple of 128 (full-dim block on C).
    N3, C3, T3 = 19, 96, 1.0
    s3 = jax.random.normal(k3, (N3, C3), dtype=jnp.float32)
    t3 = jax.random.normal(k4, (N3, C3), dtype=jnp.float32)
    out3 = jax.block_until_ready(ce_loss(s3, t3, temperature=T3))
    ref3 = _ce_loss_ref(s3, t3, temperature=T3)
    assert jnp.allclose(out3, ref3, rtol=1e-4, atol=1e-5), (out3, ref3)

    print("KERNEL_OK")
</pallas_src>

<mosaic_0001>
module attributes {stable_mosaic.version = 11 : i64} {
  func.func @_ce_loss_kernel(%arg0: i32, %arg1: memref<16x256xf32, #tpu.memory_space<vmem>>, %arg2: memref<16x256xf32, #tpu.memory_space<vmem>>, %arg3: memref<1x8x128xf32, #tpu.memory_space<vmem>>) attributes {dimension_semantics = [#tpu.dimension_semantics<parallel>], iteration_bounds = array<i64: 4>, scalar_prefetch = 0 : i64, scratch_operands = 0 : i64, tpu.core_type = #tpu.core_type<tc>, window_params = [{transform_indices = @transform_0, window_bounds = array<i64: 16, 256>}, {transform_indices = @transform_1, window_bounds = array<i64: 16, 256>}, {transform_indices = @transform_2, window_bounds = array<i64: 1, 8, 128>}]} {
    %c0 = arith.constant 0 : index
    %c0_0 = arith.constant 0 : index
    %0 = vector.load %arg1[%c0, %c0_0] : memref<16x256xf32, #tpu.memory_space<vmem>>, vector<16x256xf32>
    %cst = arith.constant 5.000000e-01 : f32
    %1 = vector.broadcast %cst : f32 to vector<16x256xf32>
    %2 = arith.mulf %0, %1 : vector<16x256xf32>
    %c0_1 = arith.constant 0 : index
    %c0_2 = arith.constant 0 : index
    %3 = vector.load %arg2[%c0_1, %c0_2] : memref<16x256xf32, #tpu.memory_space<vmem>>, vector<16x256xf32>
    %cst_3 = arith.constant 5.000000e-01 : f32
    %4 = vector.broadcast %cst_3 : f32 to vector<16x256xf32>
    %5 = arith.mulf %3, %4 : vector<16x256xf32>
    %cst_4 = arith.constant dense<0xFF800000> : vector<16xf32>
    %6 = vector.multi_reduction <maximumf>, %2, %cst_4 [1] : vector<16x256xf32> to vector<16xf32>
    %7 = vector.shape_cast %6 : vector<16xf32> to vector<16x1xf32>
    %8 = vector.broadcast %7 : vector<16x1xf32> to vector<16x256xf32>
    %9 = arith.subf %2, %8 : vector<16x256xf32>
    %10 = math.exp %9 : vector<16x256xf32>
    %cst_5 = arith.constant dense<0.000000e+00> : vector<16xf32>
    %11 = vector.multi_reduction <add>, %10, %cst_5 [1] : vector<16x256xf32> to vector<16xf32>
    %12 = vector.shape_cast %11 : vector<16xf32> to vector<16x1xf32>
    %13 = math.log %12 : vector<16x1xf32>
    %14 = vector.broadcast %13 : vector<16x1xf32> to vector<16x256xf32>
    %15 = arith.subf %9, %14 : vector<16x256xf32>
    %cst_6 = arith.constant dense<0xFF800000> : vector<16xf32>
    %16 = vector.multi_reduction <maximumf>, %5, %cst_6 [1] : vector<16x256xf32> to vector<16xf32>
    %17 = vector.shape_cast %16 : vector<16xf32> to vector<16x1xf32>
    %18 = vector.broadcast %17 : vector<16x1xf32> to vector<16x256xf32>
    %19 = arith.subf %5, %18 : vector<16x256xf32>
    %20 = math.exp %19 : vector<16x256xf32>
    %cst_7 = arith.constant dense<0.000000e+00> : vector<16xf32>
    %21 = vector.multi_reduction <add>, %20, %cst_7 [1] : vector<16x256xf32> to vector<16xf32>
    %22 = vector.shape_cast %21 : vector<16xf32> to vector<16x1xf32>
    %23 = arith.mulf %20, %15 : vector<16x256xf32>
    %cst_8 = arith.constant dense<0.000000e+00> : vector<16xf32>
    %24 = vector.multi_reduction <add>, %23, %cst_8 [1] : vector<16x256xf32> to vector<16xf32>
    %25 = vector.shape_cast %24 : vector<16xf32> to vector<16x1xf32>
    %26 = tpu.reciprocal %22 {approx = true} : vector<16x1xf32> -> vector<16x1xf32>
    %27 = arith.mulf %22, %26 : vector<16x1xf32>
    %cst_9 = arith.constant 2.000000e+00 : f32
    %28 = vector.broadcast %cst_9 : f32 to vector<16x1xf32>
    %29 = arith.subf %28, %27 : vector<16x1xf32>
    %30 = arith.mulf %26, %29 : vector<16x1xf32>
    %31 = arith.mulf %25, %30 : vector<16x1xf32>
    %32 = vector.shape_cast %31 : vector<16x1xf32> to vector<1x16x1xf32>
    %cst_10 = arith.constant dense<0.000000e+00> : vector<1xf32>
    %33 = vector.multi_reduction <add>, %32, %cst_10 [1, 2] : vector<1x16x1xf32> to vector<1xf32>
    %34 = vector.shape_cast %33 : vector<1xf32> to vector<1x1x1xf32>
    %35 = vector.extract %34[0, 0, 0] : f32 from vector<1x1x1xf32>
    %36 = vector.broadcast %35 : f32 to vector<1x8x128xf32>
    %c0_11 = arith.constant 0 : index
    %c0_12 = arith.constant 0 : index
    %c0_13 = arith.constant 0 : index
    %37 = vector.load %arg3[%c0_11, %c0_12, %c0_13] : memref<1x8x128xf32, #tpu.memory_space<vmem>>, vector<1x8x128xf32>
    tpu.vector_store %arg3[%c0_11, %c0_12, %c0_13], %36 {strides = array<i32>} : memref<1x8x128xf32, #tpu.memory_space<vmem>>, vector<1x8x128xf32>,
    return
  }
  func.func @transform_0(%arg0: i32) -> (i32, i32) {
    %c0_i32 = arith.constant 0 : i32
    %c0_i32_0 = arith.constant 0 : i32
    return %arg0, %c0_i32 : i32, i32
  }
  func.func @transform_1(%arg0: i32) -> (i32, i32) {
    %c0_i32 = arith.constant 0 : i32
    %c0_i32_0 = arith.constant 0 : i32
    return %arg0, %c0_i32 : i32, i32
  }
  func.func @transform_2(%arg0: i32) -> (i32, i32, i32) {
    %c0_i32 = arith.constant 0 : i32
    %c0_i32_0 = arith.constant 0 : i32
    %c0_i32_1 = arith.constant 0 : i32
    return %arg0, %c0_i32, %c0_i32_0 : i32, i32, i32
  }
}

</mosaic_0001>

<llo_original>
// kernel: tpu_custom_call.1
$region0: #{tpu_custom_call.1}
  #allocation0 [shape = 'u32[]', space=smem, size = 0x4, offset = 0x4, fixed_abs, tag = 'smem constant byte address 0x4 - core index']
  #allocation1 [shape = 'u32[144,128]{1,0:T(1,128)}', space=vmem, size = 0x12000, scoped, tag = 'internal scratch']
  %s0 = inlined_call_operand.hbm [shape: f32[64,256], index: 0, kind: input, shape index: {}]
  %s1 = inlined_call_operand.hbm [shape: f32[64,256], index: 1, kind: input, shape index: {}]
  %s2 = inlined_call_operand.hbm [shape: f32[4,8,128], index: 2, kind: output, shape index: {}]
  %s3 = sld [smem:[#allocation0]]
  $region49: #{tpu_custom_call.1} parent=0
    _
  %s5 = ssub.s32 1, %s3
  %s6 = scalar_select 0, %s5, %s3
  $region1: #{tpu_custom_call.1} parent=0
    #allocation2 [shape = 'u8[32768]{0}', space=vmem, size = 0x8000, scoped, tag = 'input window, operand 0']
    #allocation3 [shape = 's32[2]{0}', space=sflag, size = 0x8, scoped, tag = 'scoped memory for tpu_custom_call.1']
    #allocation4 [shape = 's32[2]{0}', space=sflag, size = 0x8, scoped, tag = 'scoped memory for tpu_custom_call.1']
    #allocation5 [shape = 'u8[32768]{0}', space=vmem, size = 0x8000, scoped, tag = 'input window, operand 1']
    #allocation6 [shape = 's32[2]{0}', space=sflag, size = 0x8, scoped, tag = 'scoped memory for tpu_custom_call.1']
    #allocation7 [shape = 'u8[8192]{0}', space=vmem, size = 0x2000, scoped, tag = 'output window, operand 0']
    %7 = vsyncpa [#allocation3], 0
    %s8 = scalar_lea.sflag [#allocation3], 1
    %9 = vsyncpa %s8, 0
    %10 = vsyncpa [#allocation6], 0
    %s11 = scalar_lea.sflag [#allocation6], 1
    %12 = vsyncpa %s11, 0
    %13 = vsyncpa [#allocation4], 0
    %s14 = scalar_lea.sflag [#allocation4], 1
    %15 = vsyncpa %s14, 0
    loop: start=0, step=1, limit=6
    $region2: #{tpu_custom_call.1} parent=1 // loop_pre_header
      _
    $region3: #{tpu_custom_call.1} parent=1 // loop_header
      %s17 = sphi 0, %s21
      %p18 = scmp.ge.s32.totalorder %s17, 6
      %s27 = sphi 0, %s29
      %s30 = sphi 0, %s27
      %s31 = sphi 0, %s30
      %s47 = sphi 0, %s31
      %s53 = sphi 0, %s55
      %s56 = sphi 0, %s53
      %s57 = sphi 0, %s56
      %s73 = sphi 0, %s57
      %s79 = sphi 0, %s81
      %s82 = sphi 0, %s79
      %s83 = sphi 0, %s82
      %s99 = sphi 0, %s83
    $region4: #{tpu_custom_call.1} parent=1 // loop_header_branch
      %20 = sbr.rel (%p18) target = $region8
    $region5: #{tpu_custom_call.1} parent=1 // loop_body
      %s22 = ssub.s32 %s17, 1
      %s23 = ssub.s32 %s17, 2
      %s24 = sadd.s32 %s17, 1
      %s25 = ssub.s32 %s17, %s24
      %p26 = scmp.eq.s32.totalorder %s25, 0
      %s28 = sadd.s32 %s27, 1
      %s29 = scalar_select %p26, %s27, %s28
      %p32 = pneg %p26
      %p33 = scmp.eq.s32.totalorder %s17, 3
      %p34 = por %p32, %p33
      %p35 = scmp.ne.s32.totalorder %s27, %s30
      %p36 = scmp.eq.s32.totalorder %s17, 0
      %p37 = por %p35, %p36
      %p38 = scmp.ne.s32.totalorder %s27, %s30
      %p39 = scmp.eq.s32.totalorder %s22, 3
      %p40 = por %p38, %p39
      %p41 = scmp.ne.s32.totalorder %s30, %s31
      %p42 = scmp.eq.s32.totalorder %s22, 0
      %p43 = por %p41, %p42
      %p44 = scmp.ne.s32.totalorder %s30, %s31
      %p45 = scmp.eq.s32.totalorder %s23, 3
      %p46 = por %p44, %p45
      %p48 = scmp.ne.s32.totalorder %s31, %s47
      %p49 = scmp.eq.s32.totalorder %s23, 0
      %p50 = por %p48, %p49
      %s51 = ssub.s32 %s17, %s24
      %p52 = scmp.eq.s32.totalorder %s51, 0
      %s54 = sadd.s32 %s53, 1
      %s55 = scalar_select %p52, %s53, %s54
      %p58 = pneg %p52
      %p59 = scmp.eq.s32.totalorder %s17, 3
      %p60 = por %p58, %p59
      %p61 = scmp.ne.s32.totalorder %s53, %s56
      %p62 = scmp.eq.s32.totalorder %s17, 0
      %p63 = por %p61, %p62
      %p64 = scmp.ne.s32.totalorder %s53, %s56
      %p65 = scmp.eq.s32.totalorder %s22, 3
      %p66 = por %p64, %p65
      %p67 = scmp.ne.s32.totalorder %s56, %s57
      %p68 = scmp.eq.s32.totalorder %s22, 0
      %p69 = por %p67, %p68
      %p70 = scmp.ne.s32.totalorder %s56, %s57
      %p71 = scmp.eq.s32.totalorder %s23, 3
      %p72 = por %p70, %p71
      %p74 = scmp.ne.s32.totalorder %s57, %s73
      %p75 = scmp.eq.s32.totalorder %s23, 0
      %p76 = por %p74, %p75
      %s77 = ssub.s32 %s17, %s24
      %p78 = scmp.eq.s32.totalorder %s77, 0
      %s80 = sadd.s32 %s79, 1
      %s81 = scalar_select %p78, %s79, %s80
      %p84 = pneg %p78
      %p85 = scmp.eq.s32.totalorder %s17, 3
      %p86 = por %p84, %p85
      %p87 = scmp.ne.s32.totalorder %s79, %s82
      %p88 = scmp.eq.s32.totalorder %s17, 0
      %p89 = por %p87, %p88
      %p90 = scmp.ne.s32.totalorder %s79, %s82
      %p91 = scmp.eq.s32.totalorder %s22, 3
      %p92 = por %p90, %p91
      %p93 = scmp.ne.s32.totalorder %s82, %s83
      %p94 = scmp.eq.s32.totalorder %s22, 0
      %p95 = por %p93, %p94
      %p96 = scmp.ne.s32.totalorder %s82, %s83
      %p97 = scmp.eq.s32.totalorder %s23, 3
      %p98 = por %p96, %p97
      %p100 = scmp.ne.s32.totalorder %s83, %s99
      %p101 = scmp.eq.s32.totalorder %s23, 0
      %p102 = por %p100, %p101
      %p103 = scmp.le.s32.totalorder 1, %s17
      %p104 = scmp.lt.s32.totalorder %s17, 5
      %p105 = pnand %p103, %p104
      %p106 = pneg %p105
      // Predicated region
      $region9: #{tpu_custom_call.1} parent=5 // pred_check
        _
      $region10: #{tpu_custom_call.1} parent=5 // pred_check_branch
        %108 = sbr.rel (%p105) target = $region12
      $region11: #{tpu_custom_call.1} parent=5 // pred_region
        %s109 = ssub.s32 %s17, 1
      $region12: #{tpu_custom_call.1} parent=5 // pred_fallthru
        _
      %p110 = scmp.lt.s32.totalorder %s17, 4
      // Predicated region
      $region13: #{tpu_custom_call.1} parent=5 // pred_check
        %p111 = pneg %p110
      $region14: #{tpu_custom_call.1} parent=5 // pred_check_branch
        %113 = sbr.rel (%p111) target = $region16
      $region15: #{tpu_custom_call.1} parent=5 // pred_region
        // Predicated region
        $region17: #{tpu_custom_call.1} parent=15 // pred_check
          %p114 = pneg %p37
        $region18: #{tpu_custom_call.1} parent=15 // pred_check_branch
          %116 = sbr.rel (%p114) target = $region20
        $region19: #{tpu_custom_call.1} parent=15 // pred_region
          %s117 = sand.u32 %s27, 1
          %s118 = scalar_lea.sflag [#allocation3], %s117
          %s119 = sand.u32 %s27, 1
          %s120 = smul.addr %s119, 32
          %s121 = scalar_lea.vmem [#allocation2], %s120
          %s122 = smul.u32 2, %s17
          %s124 = ssub.s32 512, 512
          %125 = vsyncadd %s118, %s124
          %s126 = smul.addr %s122, 2
          %s127 = smul.addr %s126, 128
          %s128 = scalar_lea.hbm %s0, %s127
          %s129 = sshll.u32 %s121, 4
          %s130 = int_to_ptr.vmem [resolvable:$true] %s129
          %135 = dma.hbm_to_vmem [thread:$0]  %s128, 512, %s130, %s118, 256, 256, 16
        $region20: #{tpu_custom_call.1} parent=15 // pred_fallthru
          _
        // Predicated region
        $region21: #{tpu_custom_call.1} parent=15 // pred_check
          %p136 = pneg %p63
        $region22: #{tpu_custom_call.1} parent=15 // pred_check_branch
          %138 = sbr.rel (%p136) target = $region24
        $region23: #{tpu_custom_call.1} parent=15 // pred_region
          %s139 = sand.u32 %s53, 1
          %s140 = scalar_lea.sflag [#allocation6], %s139
          %s141 = sand.u32 %s53, 1
          %s142 = smul.addr %s141, 32
          %s143 = scalar_lea.vmem [#allocation5], %s142
          %s144 = smul.u32 2, %s17
          %s146 = ssub.s32 512, 512
          %147 = vsyncadd %s140, %s146
          %s148 = smul.addr %s144, 2
          %s149 = smul.addr %s148, 128
          %s150 = scalar_lea.hbm %s1, %s149
          %s151 = sshll.u32 %s143, 4
          %s152 = int_to_ptr.vmem [resolvable:$true] %s151
          %157 = dma.hbm_to_vmem [thread:$0]  %s150, 512, %s152, %s140, 256, 256, 16
        $region24: #{tpu_custom_call.1} parent=15 // pred_fallthru
          _
      $region16: #{tpu_custom_call.1} parent=5 // pred_fallthru
        _
      %p158 = scmp.le.s32.totalorder 1, %s17
      %p159 = scmp.lt.s32.totalorder %s17, 5
      %p160 = pnand %p158, %p159
      %p161 = pneg %p160
      // Predicated region
      $region25: #{tpu_custom_call.1} parent=5 // pred_check
        _
      $region26: #{tpu_custom_call.1} parent=5 // pred_check_branch
        %163 = sbr.rel (%p160) target = $region28
      $region27: #{tpu_custom_call.1} parent=5 // pred_region
        %s164 = ssub.s32 %s17, 1
        %s165 = sand.u32 %s30, 1
        %s166 = scalar_lea.sflag [#allocation3], %s165
        %s167 = sand.u32 %s30, 1
        %s168 = smul.addr %s167, 32
        %s169 = scalar_lea.vmem [#allocation2], %s168
        // Predicated region
        $region29: #{tpu_custom_call.1} parent=27 // pred_check
          %p170 = pneg %p43
        $region30: #{tpu_custom_call.1} parent=27 // pred_check_branch
          %172 = sbr.rel (%p170) target = $region32
        $region31: #{tpu_custom_call.1} parent=27 // pred_region
          %173 = dma.done %s166, 512
        $region32: #{tpu_custom_call.1} parent=27 // pred_fallthru
          _
        %s174 = sand.u32 %s56, 1
        %s175 = scalar_lea.sflag [#allocation6], %s174
        %s176 = sand.u32 %s56, 1
        %s177 = smul.addr %s176, 32
        %s178 = scalar_lea.vmem [#allocation5], %s177
        // Predicated region
        $region33: #{tpu_custom_call.1} parent=27 // pred_check
          %p179 = pneg %p69
        $region34: #{tpu_custom_call.1} parent=27 // pred_check_branch
          %181 = sbr.rel (%p179) target = $region36
        $region35: #{tpu_custom_call.1} parent=27 // pred_region
          %182 = dma.done %s175, 512
        $region36: #{tpu_custom_call.1} parent=27 // pred_fallthru
          _
        %s183 = sand.u32 %s30, 1
        %s184 = scalar_lea.sflag [#allocation3], %s183
        %s185 = sand.u32 %s30, 1
        %s186 = smul.addr %s185, 32
        %s187 = scalar_lea.vmem [#allocation2], %s186
        %p188 = pneg %p43
        %p189 = pneg %p40
        %s190 = sand.u32 %s56, 1
        %s191 = scalar_lea.sflag [#allocation6], %s190
        %s192 = sand.u32 %s56, 1
        %s193 = smul.addr %s192, 32
        %s194 = scalar_lea.vmem [#allocation5], %s193
        %p195 = pneg %p69
        %p196 = pneg %p66
        %p197 = pneg %p95
        %p198 = pneg %p92
        %s199 = sand.u32 %s82, 1
        %s200 = scalar_lea.sflag [#allocation4], %s199
        %s201 = sand.u32 %s82, 1
        %s202 = smul.addr %s201, 8
        %s203 = scalar_lea.vmem [#allocation7], %s202
        %s204 = smul.u32 2, %s22
        %s205 = smul.u32 2, %s22
        %v206 = vld [vmem:[%s169] sm:$0xff]
        %v207 = vld [vmem:[%s169 + $0x8] sm:$0xff]
        %v208 = vld [vmem:[%s169 + $0x10] sm:$0xff]
        %v209 = vld [vmem:[%s169 + $0x18] sm:$0xff]
        %v210 = vmul.f32 %v206, 0.5
        %v211 = vmul.f32 %v207, 0.5
        %v212 = vmul.f32 %v208, 0.5
        %v213 = vmul.f32 %v209, 0.5
        %v214 = vld [vmem:[%s178] sm:$0xff]
        %v215 = vld [vmem:[%s178 + $0x8] sm:$0xff]
        %v216 = vld [vmem:[%s178 + $0x10] sm:$0xff]
        %v217 = vld [vmem:[%s178 + $0x18] sm:$0xff]
        %v218 = vmul.f32 %v214, 0.5
        %v219 = vmul.f32 %v215, 0.5
        %v220 = vmul.f32 %v216, 0.5
        %v221 = vmul.f32 %v217, 0.5
        %v222 = vmax.f32 %v210, %v211
        %223 = vmax.xlane.f32.xlu0 %v222
        %v224 = vpop.xlane.xlu0 %223
        %v225 = vmax.f32 %v212, %v213
        %226 = vmax.xlane.f32.xlu0 %v225
        %v227 = vpop.xlane.xlu0 %226
        %v228 = vsub.f32 %v210, %v224
        %v229 = vsub.f32 %v211, %v224
        %v230 = vsub.f32 %v212, %v227
        %v231 = vsub.f32 %v213, %v227
        %v232 = vmul.f32 %v228, 1.442695
        %v233 = vpow.pop %v232
        %v234 = vmul.f32 %v229, 1.442695
        %v235 = vpow.pop %v234
        %v236 = vmul.f32 %v230, 1.442695
        %v237 = vpow.pop %v236
        %v238 = vmul.f32 %v231, 1.442695
        %v239 = vpow.pop %v238
        %v240 = vadd.f32 %v233, %v235
        %241 = vadd.xlane.f32.xlu0 %v240
        %v242 = vpop.xlane.xlu0 %241
        %v243 = vadd.f32 %v237, %v239
        %244 = vadd.xlane.f32.xlu0 %v243
        %v245 = vpop.xlane.xlu0 %244
        %v246 = vlog2.pop %v242
        %v247 = vmul.f32 %v246, 0.6931472
        %v248 = vlog2.pop %v245
        %v249 = vmul.f32 %v248, 0.6931472
        %v250 = vsub.f32 %v228, %v247
        %v251 = vsub.f32 %v229, %v247
        %v252 = vsub.f32 %v230, %v249
        %v253 = vsub.f32 %v231, %v249
        %v254 = vmax.f32 %v218, %v219
        %255 = vmax.xlane.f32.xlu0 %v254
        %v256 = vpop.xlane.xlu0 %255
        %v257 = vmax.f32 %v220, %v221
        %258 = vmax.xlane.f32.xlu0 %v257
        %v259 = vpop.xlane.xlu0 %258
        %v260 = vsub.f32 %v218, %v256
        %v261 = vsub.f32 %v219, %v256
        %v262 = vsub.f32 %v220, %v259
        %v263 = vsub.f32 %v221, %v259
        %v264 = vmul.f32 %v260, 1.442695
        %v265 = vpow.pop %v264
        %v266 = vmul.f32 %v261, 1.442695
        %v267 = vpow.pop %v266
        %v268 = vmul.f32 %v262, 1.442695
        %v269 = vpow.pop %v268
        %v270 = vmul.f32 %v263, 1.442695
        %v271 = vpow.pop %v270
        %v272 = vadd.f32 %v265, %v267
        %273 = vadd.xlane.f32.xlu0 %v272
        %v274 = vpop.xlane.xlu0 %273
        %v275 = vadd.f32 %v269, %v271
        %276 = vadd.xlane.f32.xlu0 %v275
        %v277 = vpop.xlane.xlu0 %276
        %v278 = vmul.f32 %v265, %v250
        %v279 = vmul.f32 %v267, %v251
        %v280 = vmul.f32 %v269, %v252
        %v281 = vmul.f32 %v271, %v253
        %v282 = vadd.f32 %v278, %v279
        %283 = vadd.xlane.f32.xlu0 %v282
        %v284 = vpop.xlane.xlu0 %283
        %v285 = vadd.f32 %v280, %v281
        %286 = vadd.xlane.f32.xlu0 %v285
        %v287 = vpop.xlane.xlu0 %286
        %v288 = vrcp.pop %v274
        %v289 = vrcp.pop %v277
        %v290 = vmul.f32 %v274, %v288
        %v291 = vmul.f32 %v277, %v289
        %v292 = vsub.f32 2.0, %v290
        %v293 = vsub.f32 2.0, %v291
        %v294 = vmul.f32 %v288, %v292
        %v295 = vmul.f32 %v289, %v293
        %v296 = vmul.f32 %v284, %v294
        %v297 = vmul.f32 %v287, %v295
        %vm298 = vcmask 7168
        %v299 = vsel %vm298, %v296, 0.0
        %v300 = vsel %vm298, %v297, 0.0
        %v301 = vadd.f32 %v299, %v300
        %302 = vadd.xlane.f32.xlu0 %v301
        %v303 = vpop.xlane.xlu0 %302
        %v304 = vrot.slane %v303, 4
        %v305 = vadd.f32 %v303, %v304
        %v306 = vrot.slane %v305, 2
        %v307 = vadd.f32 %v305, %v306
        %v308 = vrot.slane %v307, 1
        %v309 = vadd.f32 %v307, %v308
        %s310 = vtos %v309
        %v311 = vstv %s310
        %312 = vst [vmem:[%s203] sm:$0xff] %v311
        %s313 = sand.u32 %s82, 1
        %s314 = scalar_lea.sflag [#allocation4], %s313
        %s315 = sand.u32 %s82, 1
        %s316 = smul.addr %s315, 8
        %s317 = scalar_lea.vmem [#allocation7], %s316
        // Predicated region
        $region37: #{tpu_custom_call.1} parent=27 // pred_check
          %p318 = pneg %p92
        $region38: #{tpu_custom_call.1} parent=27 // pred_check_branch
          %320 = sbr.rel (%p318) target = $region40
        $region39: #{tpu_custom_call.1} parent=27 // pred_region
          %s322 = ssub.s32 128, 128
          %323 = vsyncadd %s314, %s322
          %s324 = smul.addr %s22, 128
          %s325 = scalar_lea.hbm %s2, %s324
          %s327 = sshll.u32 %s317, 4
          %s328 = int_to_ptr.vmem [resolvable:$true] %s327
          %330 = dma.vmem_to_hbm [thread:$0]  %s328, 128, %s325, %s314
        $region40: #{tpu_custom_call.1} parent=27 // pred_fallthru
          _
      $region28: #{tpu_custom_call.1} parent=5 // pred_fallthru
        _
      %p331 = scmp.le.s32.totalorder 2, %s17
      // Predicated region
      $region41: #{tpu_custom_call.1} parent=5 // pred_check
        %p332 = pneg %p331
      $region42: #{tpu_custom_call.1} parent=5 // pred_check_branch
        %334 = sbr.rel (%p332) target = $region44
      $region43: #{tpu_custom_call.1} parent=5 // pred_region
        %s335 = ssub.s32 %s17, 2
        // Predicated region
        $region45: #{tpu_custom_call.1} parent=43 // pred_check
          %p336 = pneg %p98
        $region46: #{tpu_custom_call.1} parent=43 // pred_check_branch
          %338 = sbr.rel (%p336) target = $region48
        $region47: #{tpu_custom_call.1} parent=43 // pred_region
          %s339 = sand.u32 %s83, 1
          %s340 = scalar_lea.sflag [#allocation4], %s339
          %s341 = sand.u32 %s83, 1
          %s342 = smul.addr %s341, 8
          %s343 = scalar_lea.vmem [#allocation7], %s342
          %344 = dma.done %s340, 128
        $region48: #{tpu_custom_call.1} parent=43 // pred_fallthru
          _
      $region44: #{tpu_custom_call.1} parent=5 // pred_fallthru
        _
    $region6: #{tpu_custom_call.1} parent=1 // loop_footer
      %s21 = sadd.s32 1, %s17
    $region7: #{tpu_custom_call.1} parent=1 // loop_footer_branch
      %16 = sbr.rel target = $region3
    $region8: #{tpu_custom_call.1} parent=1 // loop_exit
      _
    %345 = vsyncpa [#allocation3], 1
    %s346 = scalar_lea.sflag [#allocation3], 1
    %347 = vsyncpa %s346, 1
    %348 = vsyncpa [#allocation6], 1
    %s349 = scalar_lea.sflag [#allocation6], 1
    %350 = vsyncpa %s349, 1
    %351 = vsyncpa [#allocation4], 1
    %s352 = scalar_lea.sflag [#allocation4], 1
    %353 = vsyncpa %s352, 1

</llo_original>
